<compile_context>
chip_gen: v7x
topology: tpu7x:2x2x1
jax: 0.10.0
libtpu: 0.0.40
codegen_flags: <defaults>
</compile_context>

<pallas_src>
import math
import functools

import jax
import jax.numpy as jnp
from jax.experimental import pallas as pl
from jax.experimental.pallas import tpu as pltpu


_LANE = 128
_SUBLANE = 8
_NEG_SLOPE = 0.2


def _round_up(v, m):
    return (v + m - 1) // m * m


# --------------------------------------------------------------------------
# Kernel
# --------------------------------------------------------------------------
def _fc_stack_fused_kernel(x_ref, w_ref, b_ref, o_ref, *, n_mlp, d_out_pad):
    """All EqualLinear('fused_lrelu') layers chained inside one kernel body.

    x_ref: [TB, D]          VMEM bf16 (feature columns zero-padded)
    w_ref: [n_mlp, D, D]    VMEM bf16, pre-transposed [Din, Dout],
                            (lr_mul/sqrt(in_dim) * sqrt(2)) already folded in
    b_ref: [n_mlp, 1, D]    VMEM f32, (lr_mul * sqrt(2)) already folded in
    o_ref: [TB, Dout_pad]   VMEM f32
    """
    h = x_ref[...]                                    # bf16 activations
    for l in range(n_mlp - 1):                        # static unroll, n_mlp small
        a = jnp.dot(h, w_ref[l], preferred_element_type=jnp.float32)
        a = a + b_ref[l]                              # [1, D] broadcast, f32
        a = jnp.maximum(a, a * _NEG_SLOPE)            # sqrt(2) gain pre-folded
        h = a.astype(jnp.bfloat16)
    # Last layer writes only the (lane-dense) padded output width.
    a = jnp.dot(h, w_ref[n_mlp - 1, :, :d_out_pad],
                preferred_element_type=jnp.float32)
    a = a + b_ref[n_mlp - 1, :, :d_out_pad]
    a = jnp.maximum(a, a * _NEG_SLOPE)
    o_ref[...] = a.astype(o_ref.dtype)


# --------------------------------------------------------------------------
# Parameters (raw, matching EqualLinear.__init__) and one-time prep
# --------------------------------------------------------------------------
def make_fc_stack_params(key, lr_mlp, n_mlp, in_dim, mid_dim, out_dim):
    """weight ~ N(0,1) / lr_mul (shape [out, in]), bias = 0."""
    params = []
    for i in range(n_mlp):
        s_dim0 = mid_dim
        s_dim1 = mid_dim
        if i == 0:
            s_dim0 = in_dim
        elif i == n_mlp - 1:
            s_dim1 = out_dim
        key, wkey = jax.random.split(key)
        w = jax.random.normal(wkey, (s_dim1, s_dim0), dtype=jnp.float32) / lr_mlp
        b = jnp.zeros((s_dim1,), dtype=jnp.float32)
        params.append((w, b))
    return params


def prep_fc_stack_params(params, lr_mlp):
    """One-time host-side prep (call ONCE, cache the result):
    fold all constant scaling into W/b, zero-pad features to a lane-dense
    multiple of 128, pre-transpose to [Din, Dout], stack across layers, and
    cast the matmul operands to bf16."""
    n_mlp = len(params)
    dims = [params[0][0].shape[1]] + [w.shape[0] for (w, _) in params]
    d_pad = _round_up(max(dims), _LANE)
    gain = math.sqrt(2.0)
    w_stack = jnp.zeros((n_mlp, d_pad, d_pad), dtype=jnp.float32)
    b_stack = jnp.zeros((n_mlp, 1, d_pad), dtype=jnp.float32)
    for l, (w, b) in enumerate(params):
        out_d, in_d = w.shape
        scale = (1.0 / math.sqrt(in_d)) * lr_mlp
        wt = (w * (scale * gain)).T                               # [in_d, out_d]
        w_stack = w_stack.at[l, :in_d, :out_d].set(wt)            # zero padding
        b_stack = b_stack.at[l, 0, :out_d].set(b * (lr_mlp * gain))
    # TODO(synk): on v7x the folded weight stack could be stored as fp8 to
    # halve weight VMEM/HBM; kept bf16 here for cross-generation accuracy.
    return w_stack.astype(jnp.bfloat16), b_stack


# --------------------------------------------------------------------------
# Forward
# --------------------------------------------------------------------------
def _call_fc_stack(x_pad, w_stack, b_stack, *, n_mlp, d_pad, d_out_pad, tb,
                   grid_b, vmem_limit, single_buffer_weights):
    const_kw = (dict(pipeline_mode=pl.Buffered(1))
                if single_buffer_weights else {})
    kernel = functools.partial(_fc_stack_fused_kernel,
                               n_mlp=n_mlp, d_out_pad=d_out_pad)
    return pl.pallas_call(
        kernel,
        out_shape=jax.ShapeDtypeStruct((grid_b * tb, d_out_pad), jnp.float32),
        grid_spec=pltpu.PrefetchScalarGridSpec(
            num_scalar_prefetch=0,
            grid=(grid_b,),
            in_specs=[
                # activation tile marches over the batch
                pl.BlockSpec((tb, d_pad), lambda i: (i, 0)),
                # all-layer weight/bias stacks stay VMEM-resident
                # (constant block index -> single-buffered when supported)
                pl.BlockSpec((n_mlp, d_pad, d_pad), lambda i: (0, 0, 0),
                             **const_kw),
                pl.BlockSpec((n_mlp, 1, d_pad), lambda i: (0, 0, 0),
                             **const_kw),
            ],
            out_specs=pl.BlockSpec((tb, d_out_pad), lambda i: (i, 0)),
        ),
        compiler_params=pltpu.CompilerParams(
            dimension_semantics=("parallel",),
            vmem_limit_bytes=vmem_limit,
        ),
    )(x_pad, w_stack, b_stack)


def fc_stack_forward(x, w_stack, b_stack, out_dim, *, batch_tile=512):
    """FcStack.forward as one fused Pallas call, batch-tiled.

    `w_stack`/`b_stack` are the cached outputs of prep_fc_stack_params."""
    batch, in_dim = x.shape
    n_mlp, d_pad, _ = w_stack.shape
    assert in_dim <= d_pad and out_dim <= d_pad
    d_out_pad = _round_up(out_dim, _LANE)

    # Batch tiling: sublane-aligned, and split into >=2 tiles when possible so
    # both v7x TensorCores get work on the "parallel" batch axis.
    b_pad = _round_up(batch, _SUBLANE)
    tb = min(_round_up(batch_tile, _SUBLANE), b_pad)
    if b_pad // tb < 2 and b_pad >= 2 * _SUBLANE:
        tb = _round_up((b_pad + 1) // 2, _SUBLANE)
    b_pad = _round_up(b_pad, tb)
    grid_b = b_pad // tb

    # Pad/cast activations once (bf16 halves activation HBM + VMEM traffic).
    x_pad = jnp.pad(x.astype(jnp.bfloat16),
                    ((0, b_pad - batch), (0, d_pad - in_dim)))

    # Explicit scoped-VMEM budget (lifts v5e's 16 MiB default when needed).
    w_bytes = n_mlp * d_pad * d_pad * 2
    b_bytes = n_mlp * d_pad * 4
    x_bytes = 2 * tb * d_pad * 2
    o_bytes = 2 * tb * d_out_pad * 4
    needed = 2 * (w_bytes + b_bytes) + x_bytes + o_bytes + (2 << 20)
    vmem_limit = min(max(needed, 32 << 20), 128 << 20)
    # TODO(synk): if a single weight-stack copy ever exceeds ~half the usable
    # VMEM (huge D / deep stacks), switch to streaming one layer's W per step
    # with pltpu.emit_pipeline instead of the fully resident stack.

    call = functools.partial(
        _call_fc_stack, n_mlp=n_mlp, d_pad=d_pad, d_out_pad=d_out_pad,
        tb=tb, grid_b=grid_b, vmem_limit=vmem_limit)
    try:
        out = call(x_pad, w_stack, b_stack, single_buffer_weights=True)
    except Exception:
        # Fallback for jax versions where pipeline_mode=pl.Buffered(1) is not
        # accepted by the standard pallas_call pipeline.
        out = call(x_pad, w_stack, b_stack, single_buffer_weights=False)

    return out[:batch, :out_dim]


# --------------------------------------------------------------------------
# Pure-JAX reference
# --------------------------------------------------------------------------
def _reference_forward(x, params, lr_mlp):
    """f32 reference matching EqualLinear('fused_lrelu') semantics."""
    h = x
    for (w, b) in params:
        scale = (1.0 / math.sqrt(w.shape[1])) * lr_mlp
        out = h @ (w * scale).T + b * lr_mlp
        h = math.sqrt(2.0) * jnp.where(out >= 0.0, out, 0.2 * out)
    return h


if __name__ == "__main__":
    # Small, module-consistent shapes.
    lr_mlp = 0.01
    n_mlp = 4
    in_dim = 16
    mid_dim = 32
    out_dim = 16
    batch = 8

    key = jax.random.PRNGKey(0)
    key, xkey, pkey = jax.random.split(key, 3)
    x = jax.random.normal(xkey, (batch, in_dim), dtype=jnp.float32)
    params = make_fc_stack_params(pkey, lr_mlp, n_mlp, in_dim, mid_dim, out_dim)

    # One-time parameter prep (cached; NOT re-run per forward call).
    w_stack, b_stack = prep_fc_stack_params(params, lr_mlp)
    w_stack = jax.block_until_ready(w_stack)
    b_stack = jax.block_until_ready(b_stack)

    out = fc_stack_forward(x, w_stack, b_stack, out_dim)
    out = jax.block_until_ready(out)

    ref = _reference_forward(x, params, lr_mlp)
    assert out.shape == (batch, out_dim)
    # bf16 MXU inputs/activations -> loosened tolerance vs. the f32 reference.
    assert jnp.allclose(out, ref, atol=5e-2, rtol=5e-2), float(
        jnp.max(jnp.abs(out - ref)))

    print("KERNEL_OK")
</pallas_src>

<mosaic_0001>
module attributes {stable_mosaic.version = 11 : i64} {
  func.func @_fc_stack_fused_kernel(%arg0: i32, %arg1: memref<8x128xbf16, #tpu.memory_space<vmem>>, %arg2: memref<4x128x128xbf16, #tpu.memory_space<vmem>>, %arg3: memref<4x1x128xf32, #tpu.memory_space<vmem>>, %arg4: memref<8x128xf32, #tpu.memory_space<vmem>>) attributes {dimension_semantics = [#tpu.dimension_semantics<parallel>], iteration_bounds = array<i64: 1>, scalar_prefetch = 0 : i64, scratch_operands = 0 : i64, tpu.core_type = #tpu.core_type<tc>, window_params = [{transform_indices = @transform_0, window_bounds = array<i64: 8, 128>}, {pipeline_mode = #tpu.pipeline_mode<synchronous>, transform_indices = @transform_1, window_bounds = array<i64: 4, 128, 128>}, {pipeline_mode = #tpu.pipeline_mode<synchronous>, transform_indices = @transform_2, window_bounds = array<i64: 4, 1, 128>}, {transform_indices = @transform_3, window_bounds = array<i64: 8, 128>}]} {
    %c0 = arith.constant 0 : index
    %c0_0 = arith.constant 0 : index
    %0 = vector.load %arg1[%c0, %c0_0] : memref<8x128xbf16, #tpu.memory_space<vmem>>, vector<8x128xbf16>
    %c0_1 = arith.constant 0 : index
    %c0_2 = arith.constant 0 : index
    %c0_3 = arith.constant 0 : index
    %1 = vector.load %arg2[%c0_1, %c0_2, %c0_3] : memref<4x128x128xbf16, #tpu.memory_space<vmem>>, vector<1x128x128xbf16>
    %2 = vector.shape_cast %1 : vector<1x128x128xbf16> to vector<128x128xbf16>
    %cst = arith.constant dense<0.000000e+00> : vector<8x128xf32>
    %3 = tpu.matmul %0, %2, %cst {dimension_numbers = #tpu.dot_dimension_numbers<[1], [0], [0], [1], [0, 0, 1, 1], [], []>} : vector<8x128xbf16>, vector<128x128xbf16>, vector<8x128xf32> -> vector<8x128xf32>
    %c0_4 = arith.constant 0 : index
    %c0_5 = arith.constant 0 : index
    %c0_6 = arith.constant 0 : index
    %4 = vector.load %arg3[%c0_4, %c0_5, %c0_6] : memref<4x1x128xf32, #tpu.memory_space<vmem>>, vector<1x1x128xf32>
    %5 = vector.shape_cast %4 : vector<1x1x128xf32> to vector<1x128xf32>
    %6 = vector.broadcast %5 : vector<1x128xf32> to vector<8x128xf32>
    %7 = arith.addf %3, %6 : vector<8x128xf32>
    %cst_7 = arith.constant 2.000000e-01 : f32
    %8 = vector.broadcast %cst_7 : f32 to vector<8x128xf32>
    %9 = arith.mulf %7, %8 : vector<8x128xf32>
    %10 = arith.maximumf %7, %9 : vector<8x128xf32>
    %11 = arith.truncf %10 : vector<8x128xf32> to vector<8x128xbf16>
    %c1 = arith.constant 1 : index
    %c0_8 = arith.constant 0 : index
    %c0_9 = arith.constant 0 : index
    %12 = vector.load %arg2[%c1, %c0_8, %c0_9] : memref<4x128x128xbf16, #tpu.memory_space<vmem>>, vector<1x128x128xbf16>
    %13 = vector.shape_cast %12 : vector<1x128x128xbf16> to vector<128x128xbf16>
    %cst_10 = arith.constant dense<0.000000e+00> : vector<8x128xf32>
    %14 = tpu.matmul %11, %13, %cst_10 {dimension_numbers = #tpu.dot_dimension_numbers<[1], [0], [0], [1], [0, 0, 1, 1], [], []>} : vector<8x128xbf16>, vector<128x128xbf16>, vector<8x128xf32> -> vector<8x128xf32>
    %c1_11 = arith.constant 1 : index
    %c0_12 = arith.constant 0 : index
    %c0_13 = arith.constant 0 : index
    %15 = vector.load %arg3[%c1_11, %c0_12, %c0_13] : memref<4x1x128xf32, #tpu.memory_space<vmem>>, vector<1x1x128xf32>
    %16 = vector.shape_cast %15 : vector<1x1x128xf32> to vector<1x128xf32>
    %17 = vector.broadcast %16 : vector<1x128xf32> to vector<8x128xf32>
    %18 = arith.addf %14, %17 : vector<8x128xf32>
    %cst_14 = arith.constant 2.000000e-01 : f32
    %19 = vector.broadcast %cst_14 : f32 to vector<8x128xf32>
    %20 = arith.mulf %18, %19 : vector<8x128xf32>
    %21 = arith.maximumf %18, %20 : vector<8x128xf32>
    %22 = arith.truncf %21 : vector<8x128xf32> to vector<8x128xbf16>
    %c2 = arith.constant 2 : index
    %c0_15 = arith.constant 0 : index
    %c0_16 = arith.constant 0 : index
    %23 = vector.load %arg2[%c2, %c0_15, %c0_16] : memref<4x128x128xbf16, #tpu.memory_space<vmem>>, vector<1x128x128xbf16>
    %24 = vector.shape_cast %23 : vector<1x128x128xbf16> to vector<128x128xbf16>
    %cst_17 = arith.constant dense<0.000000e+00> : vector<8x128xf32>
    %25 = tpu.matmul %22, %24, %cst_17 {dimension_numbers = #tpu.dot_dimension_numbers<[1], [0], [0], [1], [0, 0, 1, 1], [], []>} : vector<8x128xbf16>, vector<128x128xbf16>, vector<8x128xf32> -> vector<8x128xf32>
    %c2_18 = arith.constant 2 : index
    %c0_19 = arith.constant 0 : index
    %c0_20 = arith.constant 0 : index
    %26 = vector.load %arg3[%c2_18, %c0_19, %c0_20] : memref<4x1x128xf32, #tpu.memory_space<vmem>>, vector<1x1x128xf32>
    %27 = vector.shape_cast %26 : vector<1x1x128xf32> to vector<1x128xf32>
    %28 = vector.broadcast %27 : vector<1x128xf32> to vector<8x128xf32>
    %29 = arith.addf %25, %28 : vector<8x128xf32>
    %cst_21 = arith.constant 2.000000e-01 : f32
    %30 = vector.broadcast %cst_21 : f32 to vector<8x128xf32>
    %31 = arith.mulf %29, %30 : vector<8x128xf32>
    %32 = arith.maximumf %29, %31 : vector<8x128xf32>
    %33 = arith.truncf %32 : vector<8x128xf32> to vector<8x128xbf16>
    %c3 = arith.constant 3 : index
    %c0_22 = arith.constant 0 : index
    %c0_23 = arith.constant 0 : index
    %34 = vector.load %arg2[%c3, %c0_22, %c0_23] : memref<4x128x128xbf16, #tpu.memory_space<vmem>>, vector<1x128x128xbf16>
    %35 = vector.shape_cast %34 : vector<1x128x128xbf16> to vector<128x128xbf16>
    %cst_24 = arith.constant dense<0.000000e+00> : vector<8x128xf32>
    %36 = tpu.matmul %33, %35, %cst_24 {dimension_numbers = #tpu.dot_dimension_numbers<[1], [0], [0], [1], [0, 0, 1, 1], [], []>} : vector<8x128xbf16>, vector<128x128xbf16>, vector<8x128xf32> -> vector<8x128xf32>
    %c3_25 = arith.constant 3 : index
    %c0_26 = arith.constant 0 : index
    %c0_27 = arith.constant 0 : index
    %37 = vector.load %arg3[%c3_25, %c0_26, %c0_27] : memref<4x1x128xf32, #tpu.memory_space<vmem>>, vector<1x1x128xf32>
    %38 = vector.shape_cast %37 : vector<1x1x128xf32> to vector<1x128xf32>
    %39 = vector.broadcast %38 : vector<1x128xf32> to vector<8x128xf32>
    %40 = arith.addf %36, %39 : vector<8x128xf32>
    %cst_28 = arith.constant 2.000000e-01 : f32
    %41 = vector.broadcast %cst_28 : f32 to vector<8x128xf32>
    %42 = arith.mulf %40, %41 : vector<8x128xf32>
    %43 = arith.maximumf %40, %42 : vector<8x128xf32>
    %c0_29 = arith.constant 0 : index
    %c0_30 = arith.constant 0 : index
    %44 = vector.load %arg4[%c0_29, %c0_30] : memref<8x128xf32, #tpu.memory_space<vmem>>, vector<8x128xf32>
    tpu.vector_store %arg4[%c0_29, %c0_30], %43 {strides = array<i32>} : memref<8x128xf32, #tpu.memory_space<vmem>>, vector<8x128xf32>,
    return
  }
  func.func @transform_0(%arg0: i32) -> (i32, i32) {
    %c0_i32 = arith.constant 0 : i32
    %c0_i32_0 = arith.constant 0 : i32
    return %arg0, %c0_i32 : i32, i32
  }
  func.func @transform_1(%arg0: i32) -> (i32, i32, i32) {
    %c0_i32 = arith.constant 0 : i32
    %c0_i32_0 = arith.constant 0 : i32
    %c0_i32_1 = arith.constant 0 : i32
    %c0_i32_2 = arith.constant 0 : i32
    return %c0_i32, %c0_i32_0, %c0_i32_1 : i32, i32, i32
  }
  func.func @transform_2(%arg0: i32) -> (i32, i32, i32) {
    %c0_i32 = arith.constant 0 : i32
    %c0_i32_0 = arith.constant 0 : i32
    %c0_i32_1 = arith.constant 0 : i32
    %c0_i32_2 = arith.constant 0 : i32
    return %c0_i32, %c0_i32_0, %c0_i32_1 : i32, i32, i32
  }
  func.func @transform_3(%arg0: i32) -> (i32, i32) {
    %c0_i32 = arith.constant 0 : i32
    %c0_i32_0 = arith.constant 0 : i32
    return %arg0, %c0_i32 : i32, i32
  }
}

module attributes {stable_mosaic.version = 11 : i64} {
  func.func @_fc_stack_fused_kernel(%arg0: i32, %arg1: memref<8x128xbf16, #tpu.memory_space<vmem>>, %arg2: memref<4x128x128xbf16, #tpu.memory_space<vmem>>, %arg3: memref<4x1x128xf32, #tpu.memory_space<vmem>>, %arg4: memref<8x128xf32, #tpu.memory_space<vmem>>) attributes {dimension_semantics = [#tpu.dimension_semantics<parallel>], iteration_bounds = array<i64: 1>, scalar_prefetch = 0 : i64, scratch_operands = 0 : i64, tpu.core_type = #tpu.core_type<tc>, window_params = [{transform_indices = @transform_0, window_bounds = array<i64: 8, 128>}, {pipeline_mode = #tpu.pipeline_mode<synchronous>, transform_indices = @transform_1, window_bounds = array<i64: 4, 128, 128>}, {pipeline_mode = #tpu.pipeline_mode<synchronous>, transform_indices = @transform_2, window_bounds = array<i64: 4, 1, 128>}, {transform_indices = @transform_3, window_bounds = array<i64: 8, 128>}]} {
    %c0 = arith.constant 0 : index
    %c0_0 = arith.constant 0 : index
    %0 = vector.load %arg1[%c0, %c0_0] : memref<8x128xbf16, #tpu.memory_space<vmem>>, vector<8x128xbf16>
    %c0_1 = arith.constant 0 : index
    %c0_2 = arith.constant 0 : index
    %c0_3 = arith.constant 0 : index
    %1 = vector.load %arg2[%c0_1, %c0_2, %c0_3] : memref<4x128x128xbf16, #tpu.memory_space<vmem>>, vector<1x128x128xbf16>
    %2 = vector.shape_cast %1 : vector<1x128x128xbf16> to vector<128x128xbf16>
    %cst = arith.constant dense<0.000000e+00> : vector<8x128xf32>
    %3 = tpu.matmul %0, %2, %cst {dimension_numbers = #tpu.dot_dimension_numbers<[1], [0], [0], [1], [0, 0, 1, 1], [], []>} : vector<8x128xbf16>, vector<128x128xbf16>, vector<8x128xf32> -> vector<8x128xf32>
    %c0_4 = arith.constant 0 : index
    %c0_5 = arith.constant 0 : index
    %c0_6 = arith.constant 0 : index
    %4 = vector.load %arg3[%c0_4, %c0_5, %c0_6] : memref<4x1x128xf32, #tpu.memory_space<vmem>>, vector<1x1x128xf32>
    %5 = vector.shape_cast %4 : vector<1x1x128xf32> to vector<1x128xf32>
    %6 = vector.broadcast %5 : vector<1x128xf32> to vector<8x128xf32>
    %7 = arith.addf %3, %6 : vector<8x128xf32>
    %cst_7 = arith.constant 2.000000e-01 : f32
    %8 = vector.broadcast %cst_7 : f32 to vector<8x128xf32>
    %9 = arith.mulf %7, %8 : vector<8x128xf32>
    %10 = arith.maximumf %7, %9 : vector<8x128xf32>
    %11 = arith.truncf %10 : vector<8x128xf32> to vector<8x128xbf16>
    %c1 = arith.constant 1 : index
    %c0_8 = arith.constant 0 : index
    %c0_9 = arith.constant 0 : index
    %12 = vector.load %arg2[%c1, %c0_8, %c0_9] : memref<4x128x128xbf16, #tpu.memory_space<vmem>>, vector<1x128x128xbf16>
    %13 = vector.shape_cast %12 : vector<1x128x128xbf16> to vector<128x128xbf16>
    %cst_10 = arith.constant dense<0.000000e+00> : vector<8x128xf32>
    %14 = tpu.matmul %11, %13, %cst_10 {dimension_numbers = #tpu.dot_dimension_numbers<[1], [0], [0], [1], [0, 0, 1, 1], [], []>} : vector<8x128xbf16>, vector<128x128xbf16>, vector<8x128xf32> -> vector<8x128xf32>
    %c1_11 = arith.constant 1 : index
    %c0_12 = arith.constant 0 : index
    %c0_13 = arith.constant 0 : index
    %15 = vector.load %arg3[%c1_11, %c0_12, %c0_13] : memref<4x1x128xf32, #tpu.memory_space<vmem>>, vector<1x1x128xf32>
    %16 = vector.shape_cast %15 : vector<1x1x128xf32> to vector<1x128xf32>
    %17 = vector.broadcast %16 : vector<1x128xf32> to vector<8x128xf32>
    %18 = arith.addf %14, %17 : vector<8x128xf32>
    %cst_14 = arith.constant 2.000000e-01 : f32
    %19 = vector.broadcast %cst_14 : f32 to vector<8x128xf32>
    %20 = arith.mulf %18, %19 : vector<8x128xf32>
    %21 = arith.maximumf %18, %20 : vector<8x128xf32>
    %22 = arith.truncf %21 : vector<8x128xf32> to vector<8x128xbf16>
    %c2 = arith.constant 2 : index
    %c0_15 = arith.constant 0 : index
    %c0_16 = arith.constant 0 : index
    %23 = vector.load %arg2[%c2, %c0_15, %c0_16] : memref<4x128x128xbf16, #tpu.memory_space<vmem>>, vector<1x128x128xbf16>
    %24 = vector.shape_cast %23 : vector<1x128x128xbf16> to vector<128x128xbf16>
    %cst_17 = arith.constant dense<0.000000e+00> : vector<8x128xf32>
    %25 = tpu.matmul %22, %24, %cst_17 {dimension_numbers = #tpu.dot_dimension_numbers<[1], [0], [0], [1], [0, 0, 1, 1], [], []>} : vector<8x128xbf16>, vector<128x128xbf16>, vector<8x128xf32> -> vector<8x128xf32>
    %c2_18 = arith.constant 2 : index
    %c0_19 = arith.constant 0 : index
    %c0_20 = arith.constant 0 : index
    %26 = vector.load %arg3[%c2_18, %c0_19, %c0_20] : memref<4x1x128xf32, #tpu.memory_space<vmem>>, vector<1x1x128xf32>
    %27 = vector.shape_cast %26 : vector<1x1x128xf32> to vector<1x128xf32>
    %28 = vector.broadcast %27 : vector<1x128xf32> to vector<8x128xf32>
    %29 = arith.addf %25, %28 : vector<8x128xf32>
    %cst_21 = arith.constant 2.000000e-01 : f32
    %30 = vector.broadcast %cst_21 : f32 to vector<8x128xf32>
    %31 = arith.mulf %29, %30 : vector<8x128xf32>
    %32 = arith.maximumf %29, %31 : vector<8x128xf32>
    %33 = arith.truncf %32 : vector<8x128xf32> to vector<8x128xbf16>
    %c3 = arith.constant 3 : index
    %c0_22 = arith.constant 0 : index
    %c0_23 = arith.constant 0 : index
    %34 = vector.load %arg2[%c3, %c0_22, %c0_23] : memref<4x128x128xbf16, #tpu.memory_space<vmem>>, vector<1x128x128xbf16>
    %35 = vector.shape_cast %34 : vector<1x128x128xbf16> to vector<128x128xbf16>
    %cst_24 = arith.constant dense<0.000000e+00> : vector<8x128xf32>
    %36 = tpu.matmul %33, %35, %cst_24 {dimension_numbers = #tpu.dot_dimension_numbers<[1], [0], [0], [1], [0, 0, 1, 1], [], []>} : vector<8x128xbf16>, vector<128x128xbf16>, vector<8x128xf32> -> vector<8x128xf32>
    %c3_25 = arith.constant 3 : index
    %c0_26 = arith.constant 0 : index
    %c0_27 = arith.constant 0 : index
    %37 = vector.load %arg3[%c3_25, %c0_26, %c0_27] : memref<4x1x128xf32, #tpu.memory_space<vmem>>, vector<1x1x128xf32>
    %38 = vector.shape_cast %37 : vector<1x1x128xf32> to vector<1x128xf32>
    %39 = vector.broadcast %38 : vector<1x128xf32> to vector<8x128xf32>
    %40 = arith.addf %36, %39 : vector<8x128xf32>
    %cst_28 = arith.constant 2.000000e-01 : f32
    %41 = vector.broadcast %cst_28 : f32 to vector<8x128xf32>
    %42 = arith.mulf %40, %41 : vector<8x128xf32>
    %43 = arith.maximumf %40, %42 : vector<8x128xf32>
    %c0_29 = arith.constant 0 : index
    %c0_30 = arith.constant 0 : index
    %44 = vector.load %arg4[%c0_29, %c0_30] : memref<8x128xf32, #tpu.memory_space<vmem>>, vector<8x128xf32>
    tpu.vector_store %arg4[%c0_29, %c0_30], %43 {strides = array<i32>} : memref<8x128xf32, #tpu.memory_space<vmem>>, vector<8x128xf32>,
    return
  }
  func.func @transform_0(%arg0: i32) -> (i32, i32) {
    %c0_i32 = arith.constant 0 : i32
    %c0_i32_0 = arith.constant 0 : i32
    return %arg0, %c0_i32 : i32, i32
  }
  func.func @transform_1(%arg0: i32) -> (i32, i32, i32) {
    %c0_i32 = arith.constant 0 : i32
    %c0_i32_0 = arith.constant 0 : i32
    %c0_i32_1 = arith.constant 0 : i32
    %c0_i32_2 = arith.constant 0 : i32
    return %c0_i32, %c0_i32_0, %c0_i32_1 : i32, i32, i32
  }
  func.func @transform_2(%arg0: i32) -> (i32, i32, i32) {
    %c0_i32 = arith.constant 0 : i32
    %c0_i32_0 = arith.constant 0 : i32
    %c0_i32_1 = arith.constant 0 : i32
    %c0_i32_2 = arith.constant 0 : i32
    return %c0_i32, %c0_i32_0, %c0_i32_1 : i32, i32, i32
  }
  func.func @transform_3(%arg0: i32) -> (i32, i32) {
    %c0_i32 = arith.constant 0 : i32
    %c0_i32_0 = arith.constant 0 : i32
    return %arg0, %c0_i32 : i32, i32
  }
}

</mosaic_0001>

<llo_original>
// kernel: tpu_custom_call.1
$region0: #{tpu_custom_call.1}
  #allocation0 [shape = 'u32[]', space=smem, size = 0x4, offset = 0x4, fixed_abs, tag = 'smem constant byte address 0x4 - core index']
  #allocation1 [shape = 'u32[144,128]{1,0:T(1,128)}', space=vmem, size = 0x12000, scoped, tag = 'internal scratch']
  %s0 = inlined_call_operand.hbm [shape: bf16[8,128], index: 0, kind: input, shape index: {}]
  %s1 = inlined_call_operand.hbm [shape: bf16[4,128,128], index: 1, kind: input, shape index: {}]
  %s2 = inlined_call_operand.vmem [shape: f32[4,1,128], index: 2, kind: input, shape index: {}]
  %s3 = inlined_call_operand.hbm [shape: f32[8,128], index: 3, kind: output, shape index: {}]
  %s4 = sld [smem:[#allocation0]]
  $region30: #{tpu_custom_call.1} parent=0
    _
  %s6 = ssub.s32 1, %s4
  %s7 = scalar_select 0, %s6, %s4
  $region1: #{tpu_custom_call.1} parent=0
    #allocation2 [shape = 'u8[2048]{0}', space=vmem, size = 0x800, scoped, tag = 'input window, operand 0, single buffered']
    #allocation3 [shape = 's32[1]{0}', space=sflag, size = 0x4, scoped, tag = 'scoped memory for tpu_custom_call.1']
    #allocation4 [shape = 's32[1]{0}', space=sflag, size = 0x4, scoped, tag = 'scoped memory for tpu_custom_call.1']
    #allocation5 [shape = 'u8[131072]{0}', space=vmem, size = 0x20000, scoped, tag = 'input window, operand 1, single buffered']
    #allocation6 [shape = 's32[1]{0}', space=sflag, size = 0x4, scoped, tag = 'scoped memory for tpu_custom_call.1']
    #allocation7 [shape = 'u8[4096]{0}', space=vmem, size = 0x1000, scoped, tag = 'output window, operand 0, single buffered']
    %8 = vsyncpa [#allocation3], 0
    %9 = vsyncpa [#allocation6], 0
    %10 = vsyncpa [#allocation4], 0
    // Predicated region
    $region2: #{tpu_custom_call.1} parent=1 // pred_check
      _
    $region3: #{tpu_custom_call.1} parent=1 // pred_check_branch
      %12 = sbr.rel (0) target = $region5
    $region4: #{tpu_custom_call.1} parent=1 // pred_region
      %s14 = ssub.s32 64, 64
      %15 = vsyncadd [#allocation3], %s14
      %s17 = sshll.u32 [#allocation2], 4
      %s18 = int_to_ptr.vmem [resolvable:$true] %s17
      %20 = dma.hbm_to_vmem [thread:$0]  %s0, 64, %s18, [#allocation3]
    $region5: #{tpu_custom_call.1} parent=1 // pred_fallthru
      _
    // Predicated region
    $region6: #{tpu_custom_call.1} parent=1 // pred_check
      _
    $region7: #{tpu_custom_call.1} parent=1 // pred_check_branch
      %22 = sbr.rel (0) target = $region9
    $region8: #{tpu_custom_call.1} parent=1 // pred_region
      %s24 = ssub.s32 4096, 4096
      %25 = vsyncadd [#allocation6], %s24
      %s26 = sshll.u32 [#allocation5], 4
      %s27 = int_to_ptr.vmem [resolvable:$true] %s26
      %32 = dma.hbm_to_vmem [thread:$0]  %s1, 4096, %s27, [#allocation6], 64, 64, 4
    $region9: #{tpu_custom_call.1} parent=1 // pred_fallthru
      _
    // Predicated region
    $region10: #{tpu_custom_call.1} parent=1 // pred_check
      _
    $region11: #{tpu_custom_call.1} parent=1 // pred_check_branch
      %34 = sbr.rel (0) target = $region13
    $region12: #{tpu_custom_call.1} parent=1 // pred_region
      _
    $region13: #{tpu_custom_call.1} parent=1 // pred_fallthru
      _
    // Predicated region
    $region14: #{tpu_custom_call.1} parent=1 // pred_check
      _
    $region15: #{tpu_custom_call.1} parent=1 // pred_check_branch
      %36 = sbr.rel (0) target = $region17
    $region16: #{tpu_custom_call.1} parent=1 // pred_region
      %37 = dma.done [#allocation3], 64
    $region17: #{tpu_custom_call.1} parent=1 // pred_fallthru
      _
    // Predicated region
    $region18: #{tpu_custom_call.1} parent=1 // pred_check
      _
    $region19: #{tpu_custom_call.1} parent=1 // pred_check_branch
      %39 = sbr.rel (0) target = $region21
    $region20: #{tpu_custom_call.1} parent=1 // pred_region
      %40 = dma.done [#allocation6], 4096
    $region21: #{tpu_custom_call.1} parent=1 // pred_fallthru
      _
    %v42 = vld [vmem:[#allocation2] sm:$0xf]
    %v43 = vld [vmem:[#allocation5] sm:$0xf]
    %v44 = vld [vmem:[#allocation5 + $0x4] sm:$0xf]
    %v45 = vld [vmem:[#allocation5 + $0x8] sm:$0xf]
    %v46 = vld [vmem:[#allocation5 + $0xc] sm:$0xf]
    %v47 = vld [vmem:[#allocation5 + $0x10] sm:$0xf]
    %v48 = vld [vmem:[#allocation5 + $0x14] sm:$0xf]
    %v49 = vld [vmem:[#allocation5 + $0x18] sm:$0xf]
    %v50 = vld [vmem:[#allocation5 + $0x1c] sm:$0xf]
    %v51 = vld [vmem:[#allocation5 + $0x20] sm:$0xf]
    %v52 = vld [vmem:[#allocation5 + $0x24] sm:$0xf]
    %v53 = vld [vmem:[#allocation5 + $0x28] sm:$0xf]
    %v54 = vld [vmem:[#allocation5 + $0x2c] sm:$0xf]
    %v55 = vld [vmem:[#allocation5 + $0x30] sm:$0xf]
    %v56 = vld [vmem:[#allocation5 + $0x34] sm:$0xf]
    %v57 = vld [vmem:[#allocation5 + $0x38] sm:$0xf]
    %v58 = vld [vmem:[#allocation5 + $0x3c] sm:$0xf]
    %v59 = vld [vmem:[%s2] sm:$0x1]
    %v61 = vlaneseq
    %v62 = vshrl.u32 %v61, 7
    %v63 = vsub.s32 0, %v62
    %v64 = vrot.slane %v59, %v63
    %v82 = vunpack.c.l.b16 %v43
    %v83 = vunpack.c.l.b16 %v44
    %v84 = vunpack.c.l.b16 %v45
    %v85 = vunpack.c.l.b16 %v46
    %v86 = vunpack.c.l.b16 %v47
    %v87 = vunpack.c.l.b16 %v48
    %v88 = vunpack.c.l.b16 %v49
    %v89 = vunpack.c.l.b16 %v50
    %v90 = vunpack.c.l.b16 %v51
    %v91 = vunpack.c.l.b16 %v52
    %v92 = vunpack.c.l.b16 %v53
    %v93 = vunpack.c.l.b16 %v54
    %v94 = vunpack.c.l.b16 %v55
    %v95 = vunpack.c.l.b16 %v56
    %v96 = vunpack.c.l.b16 %v57
    %v97 = vunpack.c.l.b16 %v58
    %v98 = vpack.c.b16 %v83, %v82
    %v99 = vpack.c.b16 %v85, %v84
    %v100 = vpack.c.b16 %v87, %v86
    %v101 = vpack.c.b16 %v89, %v88
    %v102 = vpack.c.b16 %v91, %v90
    %v103 = vpack.c.b16 %v93, %v92
    %v104 = vpack.c.b16 %v95, %v94
    %v105 = vpack.c.b16 %v97, %v96
    %114 = vmatprep.subr.bf16.mxu0 0
    %115 = vmatpush1.bf16.msra.mxu0 %v98
    %116 = vmatprep.subr.bf16.mxu0 0
    %117 = vmatpush1.bf16.msra.mxu0 %v99
    %118 = vmatprep.subr.bf16.mxu0 0
    %119 = vmatpush1.bf16.msra.mxu0 %v100
    %120 = vmatprep.subr.bf16.mxu0 0
    %121 = vmatpush1.bf16.msra.mxu0 %v101
    %122 = vmatprep.subr.bf16.mxu0 0
    %123 = vmatpush1.bf16.msra.mxu0 %v102
    %124 = vmatprep.subr.bf16.mxu0 0
    %125 = vmatpush1.bf16.msra.mxu0 %v103
    %126 = vmatprep.subr.bf16.mxu0 0
    %127 = vmatpush1.bf16.msra.mxu0 %v104
    %128 = vmatprep.subr.bf16.mxu0 0
    %129 = vmatpush1.bf16.msra.mxu0 %v105
    %130 = vmatprep.subr.bf16.mxu0 0
    %131 = vmatpush1.bf16.msra.mxu0 0
    %132 = vmatprep.subr.bf16.mxu0 0
    %133 = vmatpush1.bf16.msra.mxu0 0
    %134 = vmatprep.subr.bf16.mxu0 0
    %135 = vmatpush1.bf16.msra.mxu0 0
    %136 = vmatprep.subr.bf16.mxu0 0
    %137 = vmatpush1.bf16.msra.mxu0 0
    %138 = vmatprep.subr.bf16.mxu0 0
    %139 = vmatpush1.bf16.msra.mxu0 0
    %140 = vmatprep.subr.bf16.mxu0 0
    %141 = vmatpush1.bf16.msra.mxu0 0
    %142 = vmatprep.subr.bf16.mxu0 0
    %143 = vmatpush1.bf16.msra.mxu0 0
    %144 = vmatprep.subr.bf16.mxu0 0
    %145 = vmatpush1.bf16.msra.mxu0 0
    %146 = vmatprep.mubr.bf16.mxu0 0
    %147 = vmatmul.mubr.bf16.gmra.mrb[0].mxu0 %v42
    %v148 = vpop.f32.mrb[0].mxu0
    %v149 = vadd.f32 %v64, %v148
    %v150 = vpop.f32.mrb[0].mxu0
    %v151 = vpop.f32.mrb[0].mxu0
    %v152 = vpop.f32.mrb[0].mxu0
    %153 = vdwg.mxu0
    %v154 = vmul.f32 %v149, 0.2
    %v155 = vmax.f32 %v149, %v154
    %v156 = vpack.c.bf16 %v155, %v155
    %s157 = scalar_lea.vmem [#allocation5], 64
    %v158 = vld [vmem:[%s157] sm:$0xf]
    %v159 = vld [vmem:[%s157 + $0x4] sm:$0xf]
    %v160 = vld [vmem:[%s157 + $0x8] sm:$0xf]
    %v161 = vld [vmem:[%s157 + $0xc] sm:$0xf]
    %v162 = vld [vmem:[%s157 + $0x10] sm:$0xf]
    %v163 = vld [vmem:[%s157 + $0x14] sm:$0xf]
    %v164 = vld [vmem:[%s157 + $0x18] sm:$0xf]
    %v165 = vld [vmem:[%s157 + $0x1c] sm:$0xf]
    %v166 = vld [vmem:[%s157 + $0x20] sm:$0xf]
    %v167 = vld [vmem:[%s157 + $0x24] sm:$0xf]
    %v168 = vld [vmem:[%s157 + $0x28] sm:$0xf]
    %v169 = vld [vmem:[%s157 + $0x2c] sm:$0xf]
    %v170 = vld [vmem:[%s157 + $0x30] sm:$0xf]
    %v171 = vld [vmem:[%s157 + $0x34] sm:$0xf]
    %v172 = vld [vmem:[%s157 + $0x38] sm:$0xf]
    %v173 = vld [vmem:[%s157 + $0x3c] sm:$0xf]
    %s174 = scalar_lea.vmem %s2, 1
    %v175 = vld [vmem:[%s174] sm:$0x1]
    %v177 = vlaneseq
    %v178 = vshrl.u32 %v177, 7
    %v179 = vsub.s32 0, %v178
    %v180 = vrot.slane %v175, %v179
    %v198 = vunpack.c.l.b16 %v158
    %v199 = vunpack.c.l.b16 %v159
    %v200 = vunpack.c.l.b16 %v160
    %v201 = vunpack.c.l.b16 %v161
    %v202 = vunpack.c.l.b16 %v162
    %v203 = vunpack.c.l.b16 %v163
    %v204 = vunpack.c.l.b16 %v164
    %v205 = vunpack.c.l.b16 %v165
    %v206 = vunpack.c.l.b16 %v166
    %v207 = vunpack.c.l.b16 %v167
    %v208 = vunpack.c.l.b16 %v168
    %v209 = vunpack.c.l.b16 %v169
    %v210 = vunpack.c.l.b16 %v170
    %v211 = vunpack.c.l.b16 %v171
    %v212 = vunpack.c.l.b16 %v172
    %v213 = vunpack.c.l.b16 %v173
    %v214 = vpack.c.b16 %v199, %v198
    %v215 = vpack.c.b16 %v201, %v200
    %v216 = vpack.c.b16 %v203, %v202
    %v217 = vpack.c.b16 %v205, %v204
    %v218 = vpack.c.b16 %v207, %v206
    %v219 = vpack.c.b16 %v209, %v208
    %v220 = vpack.c.b16 %v211, %v210
    %v221 = vpack.c.b16 %v213, %v212
    %230 = vmatprep.subr.bf16.mxu0 0
    %231 = vmatpush1.bf16.msra.mxu0 %v214
    %232 = vmatprep.subr.bf16.mxu0 0
    %233 = vmatpush1.bf16.msra.mxu0 %v215
    %234 = vmatprep.subr.bf16.mxu0 0
    %235 = vmatpush1.bf16.msra.mxu0 %v216
    %236 = vmatprep.subr.bf16.mxu0 0
    %237 = vmatpush1.bf16.msra.mxu0 %v217
    %238 = vmatprep.subr.bf16.mxu0 0
    %239 = vmatpush1.bf16.msra.mxu0 %v218
    %240 = vmatprep.subr.bf16.mxu0 0
    %241 = vmatpush1.bf16.msra.mxu0 %v219
    %242 = vmatprep.subr.bf16.mxu0 0
    %243 = vmatpush1.bf16.msra.mxu0 %v220
    %244 = vmatprep.subr.bf16.mxu0 0
    %245 = vmatpush1.bf16.msra.mxu0 %v221
    %246 = vmatprep.subr.bf16.mxu0 0
    %247 = vmatpush1.bf16.msra.mxu0 0
    %248 = vmatprep.subr.bf16.mxu0 0
    %249 = vmatpush1.bf16.msra.mxu0 0
    %250 = vmatprep.subr.bf16.mxu0 0
    %251 = vmatpush1.bf16.msra.mxu0 0
    %252 = vmatprep.subr.bf16.mxu0 0
    %253 = vmatpush1.bf16.msra.mxu0 0
    %254 = vmatprep.subr.bf16.mxu0 0
    %255 = vmatpush1.bf16.msra.mxu0 0
    %256 = vmatprep.subr.bf16.mxu0 0
    %257 = vmatpush1.bf16.msra.mxu0 0
    %258 = vmatprep.subr.bf16.mxu0 0
    %259 = vmatpush1.bf16.msra.mxu0 0
    %260 = vmatprep.subr.bf16.mxu0 0
    %261 = vmatpush1.bf16.msra.mxu0 0
    %262 = vmatprep.mubr.bf16.mxu0 0
    %263 = vmatmul.mubr.bf16.gmra.mrb[0].mxu0 %v156
    %v264 = vpop.f32.mrb[0].mxu0
    %v265 = vadd.f32 %v180, %v264
    %v266 = vpop.f32.mrb[0].mxu0
    %v267 = vpop.f32.mrb[0].mxu0
    %v268 = vpop.f32.mrb[0].mxu0
    %269 = vdwg.mxu0
    %v270 = vmul.f32 %v265, 0.2
    %v271 = vmax.f32 %v265, %v270
    %v272 = vpack.c.bf16 %v271, %v271
    %s273 = scalar_lea.vmem [#allocation5], 128
    %v274 = vld [vmem:[%s273] sm:$0xf]
    %v275 = vld [vmem:[%s273 + $0x4] sm:$0xf]
    %v276 = vld [vmem:[%s273 + $0x8] sm:$0xf]
    %v277 = vld [vmem:[%s273 + $0xc] sm:$0xf]
    %v278 = vld [vmem:[%s273 + $0x10] sm:$0xf]
    %v279 = vld [vmem:[%s273 + $0x14] sm:$0xf]
    %v280 = vld [vmem:[%s273 + $0x18] sm:$0xf]
    %v281 = vld [vmem:[%s273 + $0x1c] sm:$0xf]
    %v282 = vld [vmem:[%s273 + $0x20] sm:$0xf]
    %v283 = vld [vmem:[%s273 + $0x24] sm:$0xf]
    %v284 = vld [vmem:[%s273 + $0x28] sm:$0xf]
    %v285 = vld [vmem:[%s273 + $0x2c] sm:$0xf]
    %v286 = vld [vmem:[%s273 + $0x30] sm:$0xf]
    %v287 = vld [vmem:[%s273 + $0x34] sm:$0xf]
    %v288 = vld [vmem:[%s273 + $0x38] sm:$0xf]
    %v289 = vld [vmem:[%s273 + $0x3c] sm:$0xf]
    %s290 = scalar_lea.vmem %s2, 2
    %v291 = vld [vmem:[%s290] sm:$0x1]
    %v293 = vlaneseq
    %v294 = vshrl.u32 %v293, 7
    %v295 = vsub.s32 0, %v294
    %v296 = vrot.slane %v291, %v295
    %v314 = vunpack.c.l.b16 %v274
    %v315 = vunpack.c.l.b16 %v275
    %v316 = vunpack.c.l.b16 %v276
    %v317 = vunpack.c.l.b16 %v277
    %v318 = vunpack.c.l.b16 %v278
    %v319 = vunpack.c.l.b16 %v279
    %v320 = vunpack.c.l.b16 %v280
    %v321 = vunpack.c.l.b16 %v281
    %v322 = vunpack.c.l.b16 %v282
    %v323 = vunpack.c.l.b16 %v283
    %v324 = vunpack.c.l.b16 %v284
    %v325 = vunpack.c.l.b16 %v285
    %v326 = vunpack.c.l.b16 %v286
    %v327 = vunpack.c.l.b16 %v287
    %v328 = vunpack.c.l.b16 %v288
    %v329 = vunpack.c.l.b16 %v289
    %v330 = vpack.c.b16 %v315, %v314
    %v331 = vpack.c.b16 %v317, %v316
    %v332 = vpack.c.b16 %v319, %v318
    %v333 = vpack.c.b16 %v321, %v320
    %v334 = vpack.c.b16 %v323, %v322
    %v335 = vpack.c.b16 %v325, %v324
    %v336 = vpack.c.b16 %v327, %v326
    %v337 = vpack.c.b16 %v329, %v328
    %346 = vmatprep.subr.bf16.mxu0 0
    %347 = vmatpush1.bf16.msra.mxu0 %v330
    %348 = vmatprep.subr.bf16.mxu0 0
    %349 = vmatpush1.bf16.msra.mxu0 %v331
    %350 = vmatprep.subr.bf16.mxu0 0
    %351 = vmatpush1.bf16.msra.mxu0 %v332
    %352 = vmatprep.subr.bf16.mxu0 0
    %353 = vmatpush1.bf16.msra.mxu0 %v333
    %354 = vmatprep.subr.bf16.mxu0 0
    %355 = vmatpush1.bf16.msra.mxu0 %v334
    %356 = vmatprep.subr.bf16.mxu0 0
    %357 = vmatpush1.bf16.msra.mxu0 %v335
    %358 = vmatprep.subr.bf16.mxu0 0
    %359 = vmatpush1.bf16.msra.mxu0 %v336
    %360 = vmatprep.subr.bf16.mxu0 0
    %361 = vmatpush1.bf16.msra.mxu0 %v337
    %362 = vmatprep.subr.bf16.mxu0 0
    %363 = vmatpush1.bf16.msra.mxu0 0
    %364 = vmatprep.subr.bf16.mxu0 0
    %365 = vmatpush1.bf16.msra.mxu0 0
    %366 = vmatprep.subr.bf16.mxu0 0
    %367 = vmatpush1.bf16.msra.mxu0 0
    %368 = vmatprep.subr.bf16.mxu0 0
    %369 = vmatpush1.bf16.msra.mxu0 0
    %370 = vmatprep.subr.bf16.mxu0 0
    %371 = vmatpush1.bf16.msra.mxu0 0
    %372 = vmatprep.subr.bf16.mxu0 0
    %373 = vmatpush1.bf16.msra.mxu0 0
    %374 = vmatprep.subr.bf16.mxu0 0
    %375 = vmatpush1.bf16.msra.mxu0 0
    %376 = vmatprep.subr.bf16.mxu0 0
    %377 = vmatpush1.bf16.msra.mxu0 0
    %378 = vmatprep.mubr.bf16.mxu0 0
    %379 = vmatmul.mubr.bf16.gmra.mrb[0].mxu0 %v272
    %v380 = vpop.f32.mrb[0].mxu0
    %v381 = vadd.f32 %v296, %v380
    %v382 = vpop.f32.mrb[0].mxu0
    %v383 = vpop.f32.mrb[0].mxu0
    %v384 = vpop.f32.mrb[0].mxu0
    %385 = vdwg.mxu0
    %v386 = vmul.f32 %v381, 0.2
    %v387 = vmax.f32 %v381, %v386
    %v388 = vpack.c.bf16 %v387, %v387
    %s389 = scalar_lea.vmem [#allocation5], 192
    %v390 = vld [vmem:[%s389] sm:$0xf]
    %v391 = vld [vmem:[%s389 + $0x4] sm:$0xf]
    %v392 = vld [vmem:[%s389 + $0x8] sm:$0xf]
    %v393 = vld [vmem:[%s389 + $0xc] sm:$0xf]
    %v394 = vld [vmem:[%s389 + $0x10] sm:$0xf]
    %v395 = vld [vmem:[%s389 + $0x14] sm:$0xf]
    %v396 = vld [vmem:[%s389 + $0x18] sm:$0xf]
    %v397 = vld [vmem:[%s389 + $0x1c] sm:$0xf]
    %v398 = vld [vmem:[%s389 + $0x20] sm:$0xf]
    %v399 = vld [vmem:[%s389 + $0x24] sm:$0xf]
    %v400 = vld [vmem:[%s389 + $0x28] sm:$0xf]
    %v401 = vld [vmem:[%s389 + $0x2c] sm:$0xf]
    %v402 = vld [vmem:[%s389 + $0x30] sm:$0xf]
    %v403 = vld [vmem:[%s389 + $0x34] sm:$0xf]
    %v404 = vld [vmem:[%s389 + $0x38] sm:$0xf]
    %v405 = vld [vmem:[%s389 + $0x3c] sm:$0xf]
    %s406 = scalar_lea.vmem %s2, 3
    %v407 = vld [vmem:[%s406] sm:$0x1]
    %v409 = vlaneseq
    %v410 = vshrl.u32 %v409, 7
    %v411 = vsub.s32 0, %v410
    %v412 = vrot.slane %v407, %v411
    %v430 = vunpack.c.l.b16 %v390
    %v431 = vunpack.c.l.b16 %v391
    %v432 = vunpack.c.l.b16 %v392
    %v433 = vunpack.c.l.b16 %v393
    %v434 = vunpack.c.l.b16 %v394
    %v435 = vunpack.c.l.b16 %v395
    %v436 = vunpack.c.l.b16 %v396
    %v437 = vunpack.c.l.b16 %v397
    %v438 = vunpack.c.l.b16 %v398
    %v439 = vunpack.c.l.b16 %v399
    %v440 = vunpack.c.l.b16 %v400
    %v441 = vunpack.c.l.b16 %v401
    %v442 = vunpack.c.l.b16 %v402
    %v443 = vunpack.c.l.b16 %v403
    %v444 = vunpack.c.l.b16 %v404
    %v445 = vunpack.c.l.b16 %v405
    %v446 = vpack.c.b16 %v431, %v430
    %v447 = vpack.c.b16 %v433, %v432
    %v448 = vpack.c.b16 %v435, %v434
    %v449 = vpack.c.b16 %v437, %v436
    %v450 = vpack.c.b16 %v439, %v438
    %v451 = vpack.c.b16 %v441, %v440
    %v452 = vpack.c.b16 %v443, %v442
    %v453 = vpack.c.b16 %v445, %v444
    %462 = vmatprep.subr.bf16.mxu0 0
    %463 = vmatpush1.bf16.msra.mxu0 %v446
    %464 = vmatprep.subr.bf16.mxu0 0
    %465 = vmatpush1.bf16.msra.mxu0 %v447
    %466 = vmatprep.subr.bf16.mxu0 0
    %467 = vmatpush1.bf16.msra.mxu0 %v448
    %468 = vmatprep.subr.bf16.mxu0 0
    %469 = vmatpush1.bf16.msra.mxu0 %v449
    %470 = vmatprep.subr.bf16.mxu0 0
    %471 = vmatpush1.bf16.msra.mxu0 %v450
    %472 = vmatprep.subr.bf16.mxu0 0
    %473 = vmatpush1.bf16.msra.mxu0 %v451
    %474 = vmatprep.subr.bf16.mxu0 0
    %475 = vmatpush1.bf16.msra.mxu0 %v452
    %476 = vmatprep.subr.bf16.mxu0 0
    %477 = vmatpush1.bf16.msra.mxu0 %v453
    %478 = vmatprep.subr.bf16.mxu0 0
    %479 = vmatpush1.bf16.msra.mxu0 0
    %480 = vmatprep.subr.bf16.mxu0 0
    %481 = vmatpush1.bf16.msra.mxu0 0
    %482 = vmatprep.subr.bf16.mxu0 0
    %483 = vmatpush1.bf16.msra.mxu0 0
    %484 = vmatprep.subr.bf16.mxu0 0
    %485 = vmatpush1.bf16.msra.mxu0 0
    %486 = vmatprep.subr.bf16.mxu0 0
    %487 = vmatpush1.bf16.msra.mxu0 0
    %488 = vmatprep.subr.bf16.mxu0 0
    %489 = vmatpush1.bf16.msra.mxu0 0
    %490 = vmatprep.subr.bf16.mxu0 0
    %491 = vmatpush1.bf16.msra.mxu0 0
    %492 = vmatprep.subr.bf16.mxu0 0
    %493 = vmatpush1.bf16.msra.mxu0 0
    %494 = vmatprep.mubr.bf16.mxu0 0
    %495 = vmatmul.mubr.bf16.gmra.mrb[0].mxu0 %v388
    %v496 = vpop.f32.mrb[0].mxu0
    %v497 = vadd.f32 %v412, %v496
    %v498 = vpop.f32.mrb[0].mxu0
    %v499 = vpop.f32.mrb[0].mxu0
    %v500 = vpop.f32.mrb[0].mxu0
    %501 = vdwg.mxu0
    %v502 = vmul.f32 %v497, 0.2
    %v503 = vmax.f32 %v497, %v502
    %504 = vst [vmem:[#allocation7] sm:$0xff] %v503
    // Predicated region
    $region22: #{tpu_custom_call.1} parent=1 // pred_check
      _
    $region23: #{tpu_custom_call.1} parent=1 // pred_check_branch
      %506 = sbr.rel (0) target = $region25
    $region24: #{tpu_custom_call.1} parent=1 // pred_region
      %s508 = ssub.s32 128, 128
      %509 = vsyncadd [#allocation4], %s508
      %s511 = sshll.u32 [#allocation7], 4
      %s512 = int_to_ptr.vmem [resolvable:$true] %s511
      %514 = dma.vmem_to_hbm [thread:$0]  %s512, 128, %s3, [#allocation4]
    $region25: #{tpu_custom_call.1} parent=1 // pred_fallthru
      _
    // Predicated region
    $region26: #{tpu_custom_call.1} parent=1 // pred_check
      _
    $region27: #{tpu_custom_call.1} parent=1 // pred_check_branch
      %516 = sbr.rel (0) target = $region29
    $region28: #{tpu_custom_call.1} parent=1 // pred_region
      %517 = dma.done [#allocation4], 128
    $region29: #{tpu_custom_call.1} parent=1 // pred_fallthru
      _
    %518 = vsyncpa [#allocation3], 1
    %519 = vsyncpa [#allocation6], 1
    %520 = vsyncpa [#allocation4], 1

// kernel: tpu_custom_call.1
$region0: #{tpu_custom_call.1}
  #allocation0 [shape = 'u32[]', space=smem, size = 0x4, offset = 0x4, fixed_abs, tag = 'smem constant byte address 0x4 - core index']
  #allocation1 [shape = 'u32[144,128]{1,0:T(1,128)}', space=vmem, size = 0x12000, scoped, tag = 'internal scratch']
  %s0 = inlined_call_operand.hbm [shape: bf16[8,128], index: 0, kind: input, shape index: {}]
  %s1 = inlined_call_operand.hbm [shape: bf16[4,128,128], index: 1, kind: input, shape index: {}]
  %s2 = inlined_call_operand.vmem [shape: f32[4,1,128], index: 2, kind: input, shape index: {}]
  %s3 = inlined_call_operand.hbm [shape: f32[8,128], index: 3, kind: output, shape index: {}]
  %s4 = sld [smem:[#allocation0]]
  $region30: #{tpu_custom_call.1} parent=0
    _
  %s6 = ssub.s32 1, %s4
  %s7 = scalar_select 0, %s6, %s4
  $region1: #{tpu_custom_call.1} parent=0
    #allocation2 [shape = 'u8[2048]{0}', space=vmem, size = 0x800, scoped, tag = 'input window, operand 0, single buffered']
    #allocation3 [shape = 's32[1]{0}', space=sflag, size = 0x4, scoped, tag = 'scoped memory for tpu_custom_call.1']
    #allocation4 [shape = 's32[1]{0}', space=sflag, size = 0x4, scoped, tag = 'scoped memory for tpu_custom_call.1']
    #allocation5 [shape = 'u8[131072]{0}', space=vmem, size = 0x20000, scoped, tag = 'input window, operand 1, single buffered']
    #allocation6 [shape = 's32[1]{0}', space=sflag, size = 0x4, scoped, tag = 'scoped memory for tpu_custom_call.1']
    #allocation7 [shape = 'u8[4096]{0}', space=vmem, size = 0x1000, scoped, tag = 'output window, operand 0, single buffered']
    %8 = vsyncpa [#allocation3], 0
    %9 = vsyncpa [#allocation6], 0
    %10 = vsyncpa [#allocation4], 0
    // Predicated region
    $region2: #{tpu_custom_call.1} parent=1 // pred_check
      _
    $region3: #{tpu_custom_call.1} parent=1 // pred_check_branch
      %12 = sbr.rel (0) target = $region5
    $region4: #{tpu_custom_call.1} parent=1 // pred_region
      %s14 = ssub.s32 64, 64
      %15 = vsyncadd [#allocation3], %s14
      %s17 = sshll.u32 [#allocation2], 4
      %s18 = int_to_ptr.vmem [resolvable:$true] %s17
      %20 = dma.hbm_to_vmem [thread:$0]  %s0, 64, %s18, [#allocation3]
    $region5: #{tpu_custom_call.1} parent=1 // pred_fallthru
      _
    // Predicated region
    $region6: #{tpu_custom_call.1} parent=1 // pred_check
      _
    $region7: #{tpu_custom_call.1} parent=1 // pred_check_branch
      %22 = sbr.rel (0) target = $region9
    $region8: #{tpu_custom_call.1} parent=1 // pred_region
      %s24 = ssub.s32 4096, 4096
      %25 = vsyncadd [#allocation6], %s24
      %s26 = sshll.u32 [#allocation5], 4
      %s27 = int_to_ptr.vmem [resolvable:$true] %s26
      %32 = dma.hbm_to_vmem [thread:$0]  %s1, 4096, %s27, [#allocation6], 64, 64, 4
    $region9: #{tpu_custom_call.1} parent=1 // pred_fallthru
      _
    // Predicated region
    $region10: #{tpu_custom_call.1} parent=1 // pred_check
      _
    $region11: #{tpu_custom_call.1} parent=1 // pred_check_branch
      %34 = sbr.rel (0) target = $region13
    $region12: #{tpu_custom_call.1} parent=1 // pred_region
      _
    $region13: #{tpu_custom_call.1} parent=1 // pred_fallthru
      _
    // Predicated region
    $region14: #{tpu_custom_call.1} parent=1 // pred_check
      _
    $region15: #{tpu_custom_call.1} parent=1 // pred_check_branch
      %36 = sbr.rel (0) target = $region17
    $region16: #{tpu_custom_call.1} parent=1 // pred_region
      %37 = dma.done [#allocation3], 64
    $region17: #{tpu_custom_call.1} parent=1 // pred_fallthru
      _
    // Predicated region
    $region18: #{tpu_custom_call.1} parent=1 // pred_check
      _
    $region19: #{tpu_custom_call.1} parent=1 // pred_check_branch
      %39 = sbr.rel (0) target = $region21
    $region20: #{tpu_custom_call.1} parent=1 // pred_region
      %40 = dma.done [#allocation6], 4096
    $region21: #{tpu_custom_call.1} parent=1 // pred_fallthru
      _
    %v42 = vld [vmem:[#allocation2] sm:$0xf]
    %v43 = vld [vmem:[#allocation5] sm:$0xf]
    %v44 = vld [vmem:[#allocation5 + $0x4] sm:$0xf]
    %v45 = vld [vmem:[#allocation5 + $0x8] sm:$0xf]
    %v46 = vld [vmem:[#allocation5 + $0xc] sm:$0xf]
    %v47 = vld [vmem:[#allocation5 + $0x10] sm:$0xf]
    %v48 = vld [vmem:[#allocation5 + $0x14] sm:$0xf]
    %v49 = vld [vmem:[#allocation5 + $0x18] sm:$0xf]
    %v50 = vld [vmem:[#allocation5 + $0x1c] sm:$0xf]
    %v51 = vld [vmem:[#allocation5 + $0x20] sm:$0xf]
    %v52 = vld [vmem:[#allocation5 + $0x24] sm:$0xf]
    %v53 = vld [vmem:[#allocation5 + $0x28] sm:$0xf]
    %v54 = vld [vmem:[#allocation5 + $0x2c] sm:$0xf]
    %v55 = vld [vmem:[#allocation5 + $0x30] sm:$0xf]
    %v56 = vld [vmem:[#allocation5 + $0x34] sm:$0xf]
    %v57 = vld [vmem:[#allocation5 + $0x38] sm:$0xf]
    %v58 = vld [vmem:[#allocation5 + $0x3c] sm:$0xf]
    %v59 = vld [vmem:[%s2] sm:$0x1]
    %v61 = vlaneseq
    %v62 = vshrl.u32 %v61, 7
    %v63 = vsub.s32 0, %v62
    %v64 = vrot.slane %v59, %v63
    %v82 = vunpack.c.l.b16 %v43
    %v83 = vunpack.c.l.b16 %v44
    %v84 = vunpack.c.l.b16 %v45
    %v85 = vunpack.c.l.b16 %v46
    %v86 = vunpack.c.l.b16 %v47
    %v87 = vunpack.c.l.b16 %v48
    %v88 = vunpack.c.l.b16 %v49
    %v89 = vunpack.c.l.b16 %v50
    %v90 = vunpack.c.l.b16 %v51
    %v91 = vunpack.c.l.b16 %v52
    %v92 = vunpack.c.l.b16 %v53
    %v93 = vunpack.c.l.b16 %v54
    %v94 = vunpack.c.l.b16 %v55
    %v95 = vunpack.c.l.b16 %v56
    %v96 = vunpack.c.l.b16 %v57
    %v97 = vunpack.c.l.b16 %v58
    %v98 = vpack.c.b16 %v83, %v82
    %v99 = vpack.c.b16 %v85, %v84
    %v100 = vpack.c.b16 %v87, %v86
    %v101 = vpack.c.b16 %v89, %v88
    %v102 = vpack.c.b16 %v91, %v90
    %v103 = vpack.c.b16 %v93, %v92
    %v104 = vpack.c.b16 %v95, %v94
    %v105 = vpack.c.b16 %v97, %v96
    %114 = vmatprep.subr.bf16.mxu0 0
    %115 = vmatpush1.bf16.msra.mxu0 %v98
    %116 = vmatprep.subr.bf16.mxu0 0
    %117 = vmatpush1.bf16.msra.mxu0 %v99
    %118 = vmatprep.subr.bf16.mxu0 0
    %119 = vmatpush1.bf16.msra.mxu0 %v100
    %120 = vmatprep.subr.bf16.mxu0 0
    %121 = vmatpush1.bf16.msra.mxu0 %v101
    %122 = vmatprep.subr.bf16.mxu0 0
    %123 = vmatpush1.bf16.msra.mxu0 %v102
    %124 = vmatprep.subr.bf16.mxu0 0
    %125 = vmatpush1.bf16.msra.mxu0 %v103
    %126 = vmatprep.subr.bf16.mxu0 0
    %127 = vmatpush1.bf16.msra.mxu0 %v104
    %128 = vmatprep.subr.bf16.mxu0 0
    %129 = vmatpush1.bf16.msra.mxu0 %v105
    %130 = vmatprep.subr.bf16.mxu0 0
    %131 = vmatpush1.bf16.msra.mxu0 0
    %132 = vmatprep.subr.bf16.mxu0 0
    %133 = vmatpush1.bf16.msra.mxu0 0
    %134 = vmatprep.subr.bf16.mxu0 0
    %135 = vmatpush1.bf16.msra.mxu0 0
    %136 = vmatprep.subr.bf16.mxu0 0
    %137 = vmatpush1.bf16.msra.mxu0 0
    %138 = vmatprep.subr.bf16.mxu0 0
    %139 = vmatpush1.bf16.msra.mxu0 0
    %140 = vmatprep.subr.bf16.mxu0 0
    %141 = vmatpush1.bf16.msra.mxu0 0
    %142 = vmatprep.subr.bf16.mxu0 0
    %143 = vmatpush1.bf16.msra.mxu0 0
    %144 = vmatprep.subr.bf16.mxu0 0
    %145 = vmatpush1.bf16.msra.mxu0 0
    %146 = vmatprep.mubr.bf16.mxu0 0
    %147 = vmatmul.mubr.bf16.gmra.mrb[0].mxu0 %v42
    %v148 = vpop.f32.mrb[0].mxu0
    %v149 = vadd.f32 %v64, %v148
    %v150 = vpop.f32.mrb[0].mxu0
    %v151 = vpop.f32.mrb[0].mxu0
    %v152 = vpop.f32.mrb[0].mxu0
    %153 = vdwg.mxu0
    %v154 = vmul.f32 %v149, 0.2
    %v155 = vmax.f32 %v149, %v154
    %v156 = vpack.c.bf16 %v155, %v155
    %s157 = scalar_lea.vmem [#allocation5], 64
    %v158 = vld [vmem:[%s157] sm:$0xf]
    %v159 = vld [vmem:[%s157 + $0x4] sm:$0xf]
    %v160 = vld [vmem:[%s157 + $0x8] sm:$0xf]
    %v161 = vld [vmem:[%s157 + $0xc] sm:$0xf]
    %v162 = vld [vmem:[%s157 + $0x10] sm:$0xf]
    %v163 = vld [vmem:[%s157 + $0x14] sm:$0xf]
    %v164 = vld [vmem:[%s157 + $0x18] sm:$0xf]
    %v165 = vld [vmem:[%s157 + $0x1c] sm:$0xf]
    %v166 = vld [vmem:[%s157 + $0x20] sm:$0xf]
    %v167 = vld [vmem:[%s157 + $0x24] sm:$0xf]
    %v168 = vld [vmem:[%s157 + $0x28] sm:$0xf]
    %v169 = vld [vmem:[%s157 + $0x2c] sm:$0xf]
    %v170 = vld [vmem:[%s157 + $0x30] sm:$0xf]
    %v171 = vld [vmem:[%s157 + $0x34] sm:$0xf]
    %v172 = vld [vmem:[%s157 + $0x38] sm:$0xf]
    %v173 = vld [vmem:[%s157 + $0x3c] sm:$0xf]
    %s174 = scalar_lea.vmem %s2, 1
    %v175 = vld [vmem:[%s174] sm:$0x1]
    %v177 = vlaneseq
    %v178 = vshrl.u32 %v177, 7
    %v179 = vsub.s32 0, %v178
    %v180 = vrot.slane %v175, %v179
    %v198 = vunpack.c.l.b16 %v158
    %v199 = vunpack.c.l.b16 %v159
    %v200 = vunpack.c.l.b16 %v160
    %v201 = vunpack.c.l.b16 %v161
    %v202 = vunpack.c.l.b16 %v162
    %v203 = vunpack.c.l.b16 %v163
    %v204 = vunpack.c.l.b16 %v164
    %v205 = vunpack.c.l.b16 %v165
    %v206 = vunpack.c.l.b16 %v166
    %v207 = vunpack.c.l.b16 %v167
    %v208 = vunpack.c.l.b16 %v168
    %v209 = vunpack.c.l.b16 %v169
    %v210 = vunpack.c.l.b16 %v170
    %v211 = vunpack.c.l.b16 %v171
    %v212 = vunpack.c.l.b16 %v172
    %v213 = vunpack.c.l.b16 %v173
    %v214 = vpack.c.b16 %v199, %v198
    %v215 = vpack.c.b16 %v201, %v200
    %v216 = vpack.c.b16 %v203, %v202
    %v217 = vpack.c.b16 %v205, %v204
    %v218 = vpack.c.b16 %v207, %v206
    %v219 = vpack.c.b16 %v209, %v208
    %v220 = vpack.c.b16 %v211, %v210
    %v221 = vpack.c.b16 %v213, %v212
    %230 = vmatprep.subr.bf16.mxu0 0
    %231 = vmatpush1.bf16.msra.mxu0 %v214
    %232 = vmatprep.subr.bf16.mxu0 0
    %233 = vmatpush1.bf16.msra.mxu0 %v215
    %234 = vmatprep.subr.bf16.mxu0 0
    %235 = vmatpush1.bf16.msra.mxu0 %v216
    %236 = vmatprep.subr.bf16.mxu0 0
    %237 = vmatpush1.bf16.msra.mxu0 %v217
    %238 = vmatprep.subr.bf16.mxu0 0
    %239 = vmatpush1.bf16.msra.mxu0 %v218
    %240 = vmatprep.subr.bf16.mxu0 0
    %241 = vmatpush1.bf16.msra.mxu0 %v219
    %242 = vmatprep.subr.bf16.mxu0 0
    %243 = vmatpush1.bf16.msra.mxu0 %v220
    %244 = vmatprep.subr.bf16.mxu0 0
    %245 = vmatpush1.bf16.msra.mxu0 %v221
    %246 = vmatprep.subr.bf16.mxu0 0
    %247 = vmatpush1.bf16.msra.mxu0 0
    %248 = vmatprep.subr.bf16.mxu0 0
    %249 = vmatpush1.bf16.msra.mxu0 0
    %250 = vmatprep.subr.bf16.mxu0 0
    %251 = vmatpush1.bf16.msra.mxu0 0
    %252 = vmatprep.subr.bf16.mxu0 0
    %253 = vmatpush1.bf16.msra.mxu0 0
    %254 = vmatprep.subr.bf16.mxu0 0
    %255 = vmatpush1.bf16.msra.mxu0 0
    %256 = vmatprep.subr.bf16.mxu0 0
    %257 = vmatpush1.bf16.msra.mxu0 0
    %258 = vmatprep.subr.bf16.mxu0 0
    %259 = vmatpush1.bf16.msra.mxu0 0
    %260 = vmatprep.subr.bf16.mxu0 0
    %261 = vmatpush1.bf16.msra.mxu0 0
    %262 = vmatprep.mubr.bf16.mxu0 0
    %263 = vmatmul.mubr.bf16.gmra.mrb[0].mxu0 %v156
    %v264 = vpop.f32.mrb[0].mxu0
    %v265 = vadd.f32 %v180, %v264
    %v266 = vpop.f32.mrb[0].mxu0
    %v267 = vpop.f32.mrb[0].mxu0
    %v268 = vpop.f32.mrb[0].mxu0
    %269 = vdwg.mxu0
    %v270 = vmul.f32 %v265, 0.2
    %v271 = vmax.f32 %v265, %v270
    %v272 = vpack.c.bf16 %v271, %v271
    %s273 = scalar_lea.vmem [#allocation5], 128
    %v274 = vld [vmem:[%s273] sm:$0xf]
    %v275 = vld [vmem:[%s273 + $0x4] sm:$0xf]
    %v276 = vld [vmem:[%s273 + $0x8] sm:$0xf]
    %v277 = vld [vmem:[%s273 + $0xc] sm:$0xf]
    %v278 = vld [vmem:[%s273 + $0x10] sm:$0xf]
    %v279 = vld [vmem:[%s273 + $0x14] sm:$0xf]
    %v280 = vld [vmem:[%s273 + $0x18] sm:$0xf]
    %v281 = vld [vmem:[%s273 + $0x1c] sm:$0xf]
    %v282 = vld [vmem:[%s273 + $0x20] sm:$0xf]
    %v283 = vld [vmem:[%s273 + $0x24] sm:$0xf]
    %v284 = vld [vmem:[%s273 + $0x28] sm:$0xf]
    %v285 = vld [vmem:[%s273 + $0x2c] sm:$0xf]
    %v286 = vld [vmem:[%s273 + $0x30] sm:$0xf]
    %v287 = vld [vmem:[%s273 + $0x34] sm:$0xf]
    %v288 = vld [vmem:[%s273 + $0x38] sm:$0xf]
    %v289 = vld [vmem:[%s273 + $0x3c] sm:$0xf]
    %s290 = scalar_lea.vmem %s2, 2
    %v291 = vld [vmem:[%s290] sm:$0x1]
    %v293 = vlaneseq
    %v294 = vshrl.u32 %v293, 7
    %v295 = vsub.s32 0, %v294
    %v296 = vrot.slane %v291, %v295
    %v314 = vunpack.c.l.b16 %v274
    %v315 = vunpack.c.l.b16 %v275
    %v316 = vunpack.c.l.b16 %v276
    %v317 = vunpack.c.l.b16 %v277
    %v318 = vunpack.c.l.b16 %v278
    %v319 = vunpack.c.l.b16 %v279
    %v320 = vunpack.c.l.b16 %v280
    %v321 = vunpack.c.l.b16 %v281
    %v322 = vunpack.c.l.b16 %v282
    %v323 = vunpack.c.l.b16 %v283
    %v324 = vunpack.c.l.b16 %v284
    %v325 = vunpack.c.l.b16 %v285
    %v326 = vunpack.c.l.b16 %v286
    %v327 = vunpack.c.l.b16 %v287
    %v328 = vunpack.c.l.b16 %v288
    %v329 = vunpack.c.l.b16 %v289
    %v330 = vpack.c.b16 %v315, %v314
    %v331 = vpack.c.b16 %v317, %v316
    %v332 = vpack.c.b16 %v319, %v318
    %v333 = vpack.c.b16 %v321, %v320
    %v334 = vpack.c.b16 %v323, %v322
    %v335 = vpack.c.b16 %v325, %v324
    %v336 = vpack.c.b16 %v327, %v326
    %v337 = vpack.c.b16 %v329, %v328
    %346 = vmatprep.subr.bf16.mxu0 0
    %347 = vmatpush1.bf16.msra.mxu0 %v330
    %348 = vmatprep.subr.bf16.mxu0 0
    %349 = vmatpush1.bf16.msra.mxu0 %v331
    %350 = vmatprep.subr.bf16.mxu0 0
    %351 = vmatpush1.bf16.msra.mxu0 %v332
    %352 = vmatprep.subr.bf16.mxu0 0
    %353 = vmatpush1.bf16.msra.mxu0 %v333
    %354 = vmatprep.subr.bf16.mxu0 0
    %355 = vmatpush1.bf16.msra.mxu0 %v334
    %356 = vmatprep.subr.bf16.mxu0 0
    %357 = vmatpush1.bf16.msra.mxu0 %v335
    %358 = vmatprep.subr.bf16.mxu0 0
    %359 = vmatpush1.bf16.msra.mxu0 %v336
    %360 = vmatprep.subr.bf16.mxu0 0
    %361 = vmatpush1.bf16.msra.mxu0 %v337
    %362 = vmatprep.subr.bf16.mxu0 0
    %363 = vmatpush1.bf16.msra.mxu0 0
    %364 = vmatprep.subr.bf16.mxu0 0
    %365 = vmatpush1.bf16.msra.mxu0 0
    %366 = vmatprep.subr.bf16.mxu0 0
    %367 = vmatpush1.bf16.msra.mxu0 0
    %368 = vmatprep.subr.bf16.mxu0 0
    %369 = vmatpush1.bf16.msra.mxu0 0
    %370 = vmatprep.subr.bf16.mxu0 0
    %371 = vmatpush1.bf16.msra.mxu0 0
    %372 = vmatprep.subr.bf16.mxu0 0
    %373 = vmatpush1.bf16.msra.mxu0 0
    %374 = vmatprep.subr.bf16.mxu0 0
    %375 = vmatpush1.bf16.msra.mxu0 0
    %376 = vmatprep.subr.bf16.mxu0 0
    %377 = vmatpush1.bf16.msra.mxu0 0
    %378 = vmatprep.mubr.bf16.mxu0 0
    %379 = vmatmul.mubr.bf16.gmra.mrb[0].mxu0 %v272
    %v380 = vpop.f32.mrb[0].mxu0
    %v381 = vadd.f32 %v296, %v380
    %v382 = vpop.f32.mrb[0].mxu0
    %v383 = vpop.f32.mrb[0].mxu0
    %v384 = vpop.f32.mrb[0].mxu0
    %385 = vdwg.mxu0
    %v386 = vmul.f32 %v381, 0.2
    %v387 = vmax.f32 %v381, %v386
    %v388 = vpack.c.bf16 %v387, %v387
    %s389 = scalar_lea.vmem [#allocation5], 192
    %v390 = vld [vmem:[%s389] sm:$0xf]
    %v391 = vld [vmem:[%s389 + $0x4] sm:$0xf]
    %v392 = vld [vmem:[%s389 + $0x8] sm:$0xf]
    %v393 = vld [vmem:[%s389 + $0xc] sm:$0xf]
    %v394 = vld [vmem:[%s389 + $0x10] sm:$0xf]
    %v395 = vld [vmem:[%s389 + $0x14] sm:$0xf]
    %v396 = vld [vmem:[%s389 + $0x18] sm:$0xf]
    %v397 = vld [vmem:[%s389 + $0x1c] sm:$0xf]
    %v398 = vld [vmem:[%s389 + $0x20] sm:$0xf]
    %v399 = vld [vmem:[%s389 + $0x24] sm:$0xf]
    %v400 = vld [vmem:[%s389 + $0x28] sm:$0xf]
    %v401 = vld [vmem:[%s389 + $0x2c] sm:$0xf]
    %v402 = vld [vmem:[%s389 + $0x30] sm:$0xf]
    %v403 = vld [vmem:[%s389 + $0x34] sm:$0xf]
    %v404 = vld [vmem:[%s389 + $0x38] sm:$0xf]
    %v405 = vld [vmem:[%s389 + $0x3c] sm:$0xf]
    %s406 = scalar_lea.vmem %s2, 3
    %v407 = vld [vmem:[%s406] sm:$0x1]
    %v409 = vlaneseq
    %v410 = vshrl.u32 %v409, 7
    %v411 = vsub.s32 0, %v410
    %v412 = vrot.slane %v407, %v411
    %v430 = vunpack.c.l.b16 %v390
    %v431 = vunpack.c.l.b16 %v391
    %v432 = vunpack.c.l.b16 %v392
    %v433 = vunpack.c.l.b16 %v393
    %v434 = vunpack.c.l.b16 %v394
    %v435 = vunpack.c.l.b16 %v395
    %v436 = vunpack.c.l.b16 %v396
    %v437 = vunpack.c.l.b16 %v397
    %v438 = vunpack.c.l.b16 %v398
    %v439 = vunpack.c.l.b16 %v399
    %v440 = vunpack.c.l.b16 %v400
    %v441 = vunpack.c.l.b16 %v401
    %v442 = vunpack.c.l.b16 %v402
    %v443 = vunpack.c.l.b16 %v403
    %v444 = vunpack.c.l.b16 %v404
    %v445 = vunpack.c.l.b16 %v405
    %v446 = vpack.c.b16 %v431, %v430
    %v447 = vpack.c.b16 %v433, %v432
    %v448 = vpack.c.b16 %v435, %v434
    %v449 = vpack.c.b16 %v437, %v436
    %v450 = vpack.c.b16 %v439, %v438
    %v451 = vpack.c.b16 %v441, %v440
    %v452 = vpack.c.b16 %v443, %v442
    %v453 = vpack.c.b16 %v445, %v444
    %462 = vmatprep.subr.bf16.mxu0 0
    %463 = vmatpush1.bf16.msra.mxu0 %v446
    %464 = vmatprep.subr.bf16.mxu0 0
    %465 = vmatpush1.bf16.msra.mxu0 %v447
    %466 = vmatprep.subr.bf16.mxu0 0
    %467 = vmatpush1.bf16.msra.mxu0 %v448
    %468 = vmatprep.subr.bf16.mxu0 0
    %469 = vmatpush1.bf16.msra.mxu0 %v449
    %470 = vmatprep.subr.bf16.mxu0 0
    %471 = vmatpush1.bf16.msra.mxu0 %v450
    %472 = vmatprep.subr.bf16.mxu0 0
    %473 = vmatpush1.bf16.msra.mxu0 %v451
    %474 = vmatprep.subr.bf16.mxu0 0
    %475 = vmatpush1.bf16.msra.mxu0 %v452
    %476 = vmatprep.subr.bf16.mxu0 0
    %477 = vmatpush1.bf16.msra.mxu0 %v453
    %478 = vmatprep.subr.bf16.mxu0 0
    %479 = vmatpush1.bf16.msra.mxu0 0
    %480 = vmatprep.subr.bf16.mxu0 0
    %481 = vmatpush1.bf16.msra.mxu0 0
    %482 = vmatprep.subr.bf16.mxu0 0
    %483 = vmatpush1.bf16.msra.mxu0 0
    %484 = vmatprep.subr.bf16.mxu0 0
    %485 = vmatpush1.bf16.msra.mxu0 0
    %486 = vmatprep.subr.bf16.mxu0 0
    %487 = vmatpush1.bf16.msra.mxu0 0
    %488 = vmatprep.subr.bf16.mxu0 0
    %489 = vmatpush1.bf16.msra.mxu0 0
    %490 = vmatprep.subr.bf16.mxu0 0
    %491 = vmatpush1.bf16.msra.mxu0 0
    %492 = vmatprep.subr.bf16.mxu0 0
    %493 = vmatpush1.bf16.msra.mxu0 0
    %494 = vmatprep.mubr.bf16.mxu0 0
    %495 = vmatmul.mubr.bf16.gmra.mrb[0].mxu0 %v388
    %v496 = vpop.f32.mrb[0].mxu0
    %v497 = vadd.f32 %v412, %v496
    %v498 = vpop.f32.mrb[0].mxu0
    %v499 = vpop.f32.mrb[0].mxu0
    %v500 = vpop.f32.mrb[0].mxu0
    %501 = vdwg.mxu0
    %v502 = vmul.f32 %v497, 0.2
    %v503 = vmax.f32 %v497, %v502
    %504 = vst [vmem:[#allocation7] sm:$0xff] %v503
    // Predicated region
    $region22: #{tpu_custom_call.1} parent=1 // pred_check
      _
    $region23: #{tpu_custom_call.1} parent=1 // pred_check_branch
      %506 = sbr.rel (0) target = $region25
    $region24: #{tpu_custom_call.1} parent=1 // pred_region
      %s508 = ssub.s32 128, 128
      %509 = vsyncadd [#allocation4], %s508
      %s511 = sshll.u32 [#allocation7], 4
      %s512 = int_to_ptr.vmem [resolvable:$true] %s511
      %514 = dma.vmem_to_hbm [thread:$0]  %s512, 128, %s3, [#allocation4]
    $region25: #{tpu_custom_call.1} parent=1 // pred_fallthru
      _
    // Predicated region
    $region26: #{tpu_custom_call.1} parent=1 // pred_check
      _
    $region27: #{tpu_custom_call.1} parent=1 // pred_check_branch
      %516 = sbr.rel (0) target = $region29
    $region28: #{tpu_custom_call.1} parent=1 // pred_region
      %517 = dma.done [#allocation4], 128
    $region29: #{tpu_custom_call.1} parent=1 // pred_fallthru
      _
    %518 = vsyncpa [#allocation3], 1
    %519 = vsyncpa [#allocation6], 1
    %520 = vsyncpa [#allocation4], 1

</llo_original>
